<compile_context>
chip_gen: v7x
topology: tpu7x:2x2x1
jax: 0.10.0
libtpu: 0.0.40
codegen_flags: <defaults>
</compile_context>

<pallas_src>
import jax
import jax.numpy as jnp
from jax import lax
from jax.experimental import pallas as pl
from jax.experimental.pallas import tpu as pltpu

BN_EPS = 1e-5   # PyTorch BatchNorm1d default eps
TILE = 256      # lane-dense feature tile (matches the 256-wide MXU on v6e/v7x)


# --------------------------- kernels ----------------------------------------

def layer1_kernel(x_ref, w1_ref, gb_ref, h_ref):
    """One hidden-feature tile: Linear(no bias) + BatchNorm1d(batch stats) + ReLU.

    x_ref:  (N, Cin_p)  bf16, resident across the grid
    w1_ref: (Cin_p, T)  bf16, this tile's weight slab
    gb_ref: (2, H_p)    f32,  row 0 = gamma, row 1 = beta, resident
    h_ref:  (N, T)      bf16 output tile
    """
    n = x_ref.shape[0]
    t = h_ref.shape[1]

    # bf16 x bf16 -> f32 accumulation on the MXU.
    h = jnp.dot(x_ref[...], w1_ref[...], preferred_element_type=jnp.float32)

    # Two-pass batch statistics (biased variance, matches PyTorch training BN;
    # centered form avoids E[x^2]-E[x]^2 cancellation).
    inv_n = 1.0 / n
    mean = jnp.sum(h, axis=0, keepdims=True) * inv_n          # (1, T)
    centered = h - mean
    var = jnp.sum(centered * centered, axis=0, keepdims=True) * inv_n

    # This grid step's slice of the resident gamma/beta slab.
    off = pl.multiple_of(pl.program_id(0) * t, t)
    gamma = gb_ref[0:1, pl.ds(off, t)]                        # (1, T)
    beta = gb_ref[1:2, pl.ds(off, t)]                         # (1, T)

    # Fused normalize + affine: rsqrt on the EUP, 2 VPU ops per element.
    scale = gamma * lax.rsqrt(var + BN_EPS)
    h_ref[...] = jnp.maximum(centered * scale + beta, 0.0).astype(h_ref.dtype)


def layer3_kernel(h_ref, w3_ref, o_ref):
    """One output-feature tile: Linear + BatchNorm1d(batch stats, affine=False).

    The Linear bias b3 is intentionally absent: (y + b3) - mean(y + b3) == y - mean(y),
    so the bias is exactly cancelled by the batch-stat BN that follows it.
    """
    n = h_ref.shape[0]
    y = jnp.dot(h_ref[...], w3_ref[...], preferred_element_type=jnp.float32)

    inv_n = 1.0 / n
    mean = jnp.sum(y, axis=0, keepdims=True) * inv_n
    centered = y - mean
    var = jnp.sum(centered * centered, axis=0, keepdims=True) * inv_n

    o_ref[...] = centered * lax.rsqrt(var + BN_EPS)           # affine=False


# --------------------------- wrapper -----------------------------------------

def _pad_axis(a, mult, axis):
    pad = (-a.shape[axis]) % mult
    if pad == 0:
        return a
    widths = [(0, 0)] * a.ndim
    widths[axis] = (0, pad)
    return jnp.pad(a, widths)   # zero padding is exact for this head (see notes)


def projection_head(x, w1, gamma1, beta1, w3, *, tile=TILE):
    """Forward pass.

    x:      (N, C_in)  f32
    w1:     (C_in, H)  pre-transposed layer1 weight
    gamma1: (1, H), beta1: (1, H)  layer1 BatchNorm affine params
    w3:     (H, C_out) pre-transposed layer3 weight (bias dropped: cancelled by BN3)
    """
    n, _ = x.shape
    c_out = w3.shape[1]
    assert n % 8 == 0, "batch must be a sublane multiple (pad N to 8 if needed)"

    # Lane-dense padding of every feature axis to a multiple of `tile`.
    # Zero padding is exact here: padded C_in columns multiply zero w1 rows,
    # padded hidden columns feed zero w3 rows, padded C_out columns are sliced off.
    # Matmul operands in bf16; BN/ReLU math stays f32 inside the kernels.
    xp = _pad_axis(x, tile, 1).astype(jnp.bfloat16)
    w1p = _pad_axis(_pad_axis(w1, tile, 0), tile, 1).astype(jnp.bfloat16)
    w3p = _pad_axis(_pad_axis(w3, tile, 0), tile, 1).astype(jnp.bfloat16)
    gb = _pad_axis(
        jnp.concatenate([gamma1.reshape(1, -1), beta1.reshape(1, -1)], axis=0),
        tile, 1)                                              # (2, H_p) f32

    cin_p = xp.shape[1]
    h_p = w1p.shape[1]
    cout_p = w3p.shape[1]

    params = pltpu.CompilerParams(
        dimension_semantics=("parallel",),      # feature tiles are independent -> v7x megacore
        vmem_limit_bytes=48 * 1024 * 1024,      # stays under v7x's 64 MiB physical VMEM
    )

    # ---- layer1: grid over hidden-feature tiles --------------------------------
    cost1 = pl.CostEstimate(
        flops=2 * n * cin_p * h_p,
        transcendentals=h_p,
        bytes_accessed=xp.size * 2 + w1p.size * 2 + gb.size * 4 + n * h_p * 2,
    )
    h = pl.pallas_call(
        layer1_kernel,
        out_shape=jax.ShapeDtypeStruct((n, h_p), jnp.bfloat16),   # bf16 intermediate
        grid=(h_p // tile,),
        in_specs=[
            # x: resident across tiles -> single buffer, no re-DMA.
            pl.BlockSpec((n, cin_p), lambda k: (0, 0), pipeline_mode=pl.Buffered(1)),
            pl.BlockSpec((cin_p, tile), lambda k: (0, k)),
            # gamma/beta slab: resident, sliced per-tile inside the kernel.
            pl.BlockSpec((2, h_p), lambda k: (0, 0), pipeline_mode=pl.Buffered(1)),
        ],
        out_specs=pl.BlockSpec((n, tile), lambda k: (0, k)),
        compiler_params=params,
        cost_estimate=cost1,
    )(xp, w1p, gb)

    # ---- layer3: grid over output-feature tiles ---------------------------------
    cost3 = pl.CostEstimate(
        flops=2 * n * h_p * cout_p,
        transcendentals=cout_p,
        bytes_accessed=n * h_p * 2 + w3p.size * 2 + n * cout_p * 4,
    )
    out = pl.pallas_call(
        layer3_kernel,
        out_shape=jax.ShapeDtypeStruct((n, cout_p), jnp.float32),
        grid=(cout_p // tile,),
        in_specs=[
            # h: resident across tiles -> single buffer.
            pl.BlockSpec((n, h_p), lambda j: (0, 0), pipeline_mode=pl.Buffered(1)),
            pl.BlockSpec((h_p, tile), lambda j: (0, j)),
        ],
        out_specs=pl.BlockSpec((n, tile), lambda j: (0, j)),
        compiler_params=params,
        cost_estimate=cost3,
    )(h, w3p)

    return out[:, :c_out]


# --------------------------- reference ----------------------------------------

def reference(x, w1, gamma1, beta1, w3, b3, mxu_dtype=jnp.float32):
    """Pure-JAX reference (keeps b3 to demonstrate it is cancelled by BN3).

    mxu_dtype=jnp.bfloat16 emulates the kernel's bf16 matmul operands and bf16
    intermediate h while keeping f32 accumulation and f32 BN math.
    """
    hp = lax.Precision.HIGHEST
    h = jnp.dot(x.astype(mxu_dtype), w1.astype(mxu_dtype),
                precision=hp, preferred_element_type=jnp.float32)
    m = h.mean(0, keepdims=True)
    v = ((h - m) ** 2).mean(0, keepdims=True)
    h = (h - m) / jnp.sqrt(v + BN_EPS) * gamma1 + beta1
    h = jnp.maximum(h, 0.0).astype(mxu_dtype)                 # emulate bf16 h storage
    y = jnp.dot(h, w3.astype(mxu_dtype),
                precision=hp, preferred_element_type=jnp.float32) + b3
    m = y.mean(0, keepdims=True)
    v = ((y - m) ** 2).mean(0, keepdims=True)
    return (y - m) / jnp.sqrt(v + BN_EPS)


if __name__ == "__main__":
    # Small but lane-dense shapes (feature dims multiples of TILE after padding,
    # N >= 128 so the MXU M dimension is used, 2 grid steps per layer so the
    # per-tile gamma/beta slicing and pipelining are exercised).
    # Real SimSiam sizes would be hidden = out = 2048, N = 256-512.
    N, C_IN, HIDDEN, C_OUT = 256, 128, 512, 512

    key = jax.random.PRNGKey(0)
    kx, kw1, kw3, kb3, kg1, kb1 = jax.random.split(key, 6)

    x = jax.random.normal(kx, (N, C_IN), dtype=jnp.float32)

    # Weights stored pre-transposed: (C_in, C_out) so kernels compute x @ W.
    w1 = jax.random.normal(kw1, (C_IN, HIDDEN), dtype=jnp.float32) * (1.0 / jnp.sqrt(C_IN))
    gamma1 = 1.0 + 0.1 * jax.random.normal(kg1, (1, HIDDEN), dtype=jnp.float32)
    beta1 = 0.1 * jax.random.normal(kb1, (1, HIDDEN), dtype=jnp.float32)
    w3 = jax.random.normal(kw3, (HIDDEN, C_OUT), dtype=jnp.float32) * (1.0 / jnp.sqrt(HIDDEN))
    b3 = 0.01 * jax.random.normal(kb3, (1, C_OUT), dtype=jnp.float32)  # only used by the reference

    out = jax.block_until_ready(projection_head(x, w1, gamma1, beta1, w3))
    assert out.shape == (N, C_OUT)

    # Tight check against a reference that emulates the kernel's bf16 MXU inputs.
    ref_bf16 = reference(x, w1, gamma1, beta1, w3, b3, mxu_dtype=jnp.bfloat16)
    assert jnp.allclose(out, ref_bf16, atol=5e-3, rtol=5e-3), \
        "mismatch vs bf16-matmul reference"

    # Loose sanity check against the all-f32 reference (bf16 operands cost ~1e-2).
    ref_f32 = reference(x, w1, gamma1, beta1, w3, b3, mxu_dtype=jnp.float32)
    assert jnp.allclose(out, ref_f32, atol=1e-1, rtol=1e-1), \
        "mismatch vs f32 reference"

    print("KERNEL_OK")
</pallas_src>

<mosaic_0001>
module attributes {stable_mosaic.version = 11 : i64} {
  func.func @layer1_kernel(%arg0: i32, %arg1: memref<256x256xbf16, #tpu.memory_space<vmem>>, %arg2: memref<256x256xbf16, #tpu.memory_space<vmem>>, %arg3: memref<2x512xf32, #tpu.memory_space<vmem>>, %arg4: memref<256x256xbf16, #tpu.memory_space<vmem>>) attributes {dimension_semantics = [#tpu.dimension_semantics<parallel>], iteration_bounds = array<i64: 2>, scalar_prefetch = 0 : i64, scratch_operands = 0 : i64, tpu.core_type = #tpu.core_type<tc>, window_params = [{pipeline_mode = #tpu.pipeline_mode<synchronous>, transform_indices = @transform_0, window_bounds = array<i64: 256, 256>}, {transform_indices = @transform_1, window_bounds = array<i64: 256, 256>}, {pipeline_mode = #tpu.pipeline_mode<synchronous>, transform_indices = @transform_2, window_bounds = array<i64: 2, 512>}, {transform_indices = @transform_3, window_bounds = array<i64: 256, 256>}]} {
    %c0 = arith.constant 0 : index
    %c0_0 = arith.constant 0 : index
    %0 = vector.load %arg1[%c0, %c0_0] : memref<256x256xbf16, #tpu.memory_space<vmem>>, vector<256x256xbf16>
    %c0_1 = arith.constant 0 : index
    %c0_2 = arith.constant 0 : index
    %1 = vector.load %arg2[%c0_1, %c0_2] : memref<256x256xbf16, #tpu.memory_space<vmem>>, vector<256x256xbf16>
    %cst = arith.constant dense<0.000000e+00> : vector<256x256xf32>
    %2 = tpu.matmul %0, %1, %cst {dimension_numbers = #tpu.dot_dimension_numbers<[1], [0], [0], [1], [0, 0, 1, 1], [], []>} : vector<256x256xbf16>, vector<256x256xbf16>, vector<256x256xf32> -> vector<256x256xf32>
    %cst_3 = arith.constant dense<0.000000e+00> : vector<256xf32>
    %3 = vector.multi_reduction <add>, %2, %cst_3 [0] : vector<256x256xf32> to vector<256xf32>
    %4 = vector.shape_cast %3 : vector<256xf32> to vector<1x256xf32>
    %cst_4 = arith.constant 3.906250e-03 : f32
    %5 = vector.broadcast %cst_4 : f32 to vector<1x256xf32>
    %6 = arith.mulf %4, %5 : vector<1x256xf32>
    %7 = vector.broadcast %6 : vector<1x256xf32> to vector<256x256xf32>
    %8 = arith.subf %2, %7 : vector<256x256xf32>
    %9 = arith.mulf %8, %8 : vector<256x256xf32>
    %cst_5 = arith.constant dense<0.000000e+00> : vector<256xf32>
    %10 = vector.multi_reduction <add>, %9, %cst_5 [0] : vector<256x256xf32> to vector<256xf32>
    %11 = vector.shape_cast %10 : vector<256xf32> to vector<1x256xf32>
    %cst_6 = arith.constant 3.906250e-03 : f32
    %12 = vector.broadcast %cst_6 : f32 to vector<1x256xf32>
    %13 = arith.mulf %11, %12 : vector<1x256xf32>
    %c256_i32 = arith.constant 256 : i32
    %14 = arith.muli %arg0, %c256_i32 : i32
    %15 = tpu.assume_multiple %14, 256 : i32
    %c0_7 = arith.constant 0 : index
    %16 = arith.index_cast %15 : i32 to index
    %17 = vector.load %arg3[%c0_7, %16] : memref<2x512xf32, #tpu.memory_space<vmem>>, vector<1x256xf32>
    %c1 = arith.constant 1 : index
    %18 = arith.index_cast %15 : i32 to index
    %19 = vector.load %arg3[%c1, %18] : memref<2x512xf32, #tpu.memory_space<vmem>>, vector<1x256xf32>
    %cst_8 = arith.constant 9.99999974E-6 : f32
    %20 = vector.broadcast %cst_8 : f32 to vector<1x256xf32>
    %21 = arith.addf %13, %20 : vector<1x256xf32>
    %22 = math.rsqrt %21 : vector<1x256xf32>
    %23 = arith.mulf %17, %22 : vector<1x256xf32>
    %24 = vector.broadcast %23 : vector<1x256xf32> to vector<256x256xf32>
    %25 = arith.mulf %8, %24 : vector<256x256xf32>
    %26 = vector.broadcast %19 : vector<1x256xf32> to vector<256x256xf32>
    %27 = arith.addf %25, %26 : vector<256x256xf32>
    %cst_9 = arith.constant 0.000000e+00 : f32
    %28 = vector.broadcast %cst_9 : f32 to vector<256x256xf32>
    %29 = arith.maximumf %27, %28 : vector<256x256xf32>
    %30 = arith.truncf %29 : vector<256x256xf32> to vector<256x256xbf16>
    %c0_10 = arith.constant 0 : index
    %c0_11 = arith.constant 0 : index
    %31 = vector.load %arg4[%c0_10, %c0_11] : memref<256x256xbf16, #tpu.memory_space<vmem>>, vector<256x256xbf16>
    tpu.vector_store %arg4[%c0_10, %c0_11], %30 {strides = array<i32>} : memref<256x256xbf16, #tpu.memory_space<vmem>>, vector<256x256xbf16>,
    return
  }
  func.func @transform_0(%arg0: i32) -> (i32, i32) {
    %c0_i32 = arith.constant 0 : i32
    %c0_i32_0 = arith.constant 0 : i32
    %c0_i32_1 = arith.constant 0 : i32
    return %c0_i32, %c0_i32_0 : i32, i32
  }
  func.func @transform_1(%arg0: i32) -> (i32, i32) {
    %c0_i32 = arith.constant 0 : i32
    %c0_i32_0 = arith.constant 0 : i32
    return %c0_i32, %arg0 : i32, i32
  }
  func.func @transform_2(%arg0: i32) -> (i32, i32) {
    %c0_i32 = arith.constant 0 : i32
    %c0_i32_0 = arith.constant 0 : i32
    %c0_i32_1 = arith.constant 0 : i32
    return %c0_i32, %c0_i32_0 : i32, i32
  }
  func.func @transform_3(%arg0: i32) -> (i32, i32) {
    %c0_i32 = arith.constant 0 : i32
    %c0_i32_0 = arith.constant 0 : i32
    return %c0_i32, %arg0 : i32, i32
  }
}

</mosaic_0001>

<llo_original>
// kernel: tpu_custom_call.1
$region0: #{tpu_custom_call.1}
  #allocation0 [shape = 'u32[]', space=smem, size = 0x4, offset = 0x4, fixed_abs, tag = 'smem constant byte address 0x4 - core index']
  #allocation1 [shape = 'u32[144,128]{1,0:T(1,128)}', space=vmem, size = 0x12000, scoped, tag = 'internal scratch']
  %s0 = inlined_call_operand.hbm [shape: bf16[256,256], index: 0, kind: input, shape index: {}]
  %s1 = inlined_call_operand.hbm [shape: bf16[256,512], index: 1, kind: input, shape index: {}]
  %s2 = inlined_call_operand.hbm [shape: f32[2,512], index: 2, kind: input, shape index: {}]
  %s3 = inlined_call_operand.hbm [shape: bf16[256,512], index: 3, kind: output, shape index: {}]
  %s4 = sld [smem:[#allocation0]]
  $region57: #{tpu_custom_call.1} parent=0
    _
  %s6 = ssub.s32 1, %s4
  %s7 = scalar_select 0, %s6, %s4
  $region1: #{tpu_custom_call.1} parent=0
    #allocation2 [shape = 'u8[131072]{0}', space=vmem, size = 0x20000, scoped, tag = 'input window, operand 0, single buffered']
    #allocation3 [shape = 's32[2]{0}', space=sflag, size = 0x8, scoped, tag = 'scoped memory for tpu_custom_call.1']
    #allocation4 [shape = 's32[2]{0}', space=sflag, size = 0x8, scoped, tag = 'scoped memory for tpu_custom_call.1']
    #allocation5 [shape = 'u8[262144]{0}', space=vmem, size = 0x40000, scoped, tag = 'input window, operand 1']
    #allocation6 [shape = 's32[2]{0}', space=sflag, size = 0x8, scoped, tag = 'scoped memory for tpu_custom_call.1']
    #allocation7 [shape = 'u8[4096]{0}', space=vmem, size = 0x1000, scoped, tag = 'input window, operand 2, single buffered']
    #allocation8 [shape = 'u8[262144]{0}', space=vmem, size = 0x40000, scoped, tag = 'output window, operand 0']
    %8 = vsyncpa [#allocation3], 0
    %9 = vsyncpa [#allocation6], 0
    %s10 = scalar_lea.sflag [#allocation6], 1
    %11 = vsyncpa %s10, 0
    %12 = vsyncpa [#allocation4], 0
    %s13 = scalar_lea.sflag [#allocation4], 1
    %14 = vsyncpa %s13, 0
    loop: start=0, step=1, limit=4
    $region2: #{tpu_custom_call.1} parent=1 // loop_pre_header
      _
    $region3: #{tpu_custom_call.1} parent=1 // loop_header
      %s16 = sphi 0, %s20
      %p17 = scmp.ge.s32.totalorder %s16, 4
      %s24 = sphi 0, %s24
      %s26 = sphi 0, %s24
      %s27 = sphi 0, %s26
      %s41 = sphi 0, %s27
      %s47 = sphi 0, %s49
      %s50 = sphi 0, %s47
      %s51 = sphi 0, %s50
      %s67 = sphi 0, %s51
      %s71 = sphi 0, %s71
      %s73 = sphi 0, %s71
      %s74 = sphi 0, %s73
      %s88 = sphi 0, %s74
      %s94 = sphi 0, %s96
      %s97 = sphi 0, %s94
      %s98 = sphi 0, %s97
      %s114 = sphi 0, %s98
    $region4: #{tpu_custom_call.1} parent=1 // loop_header_branch
      %19 = sbr.rel (%p17) target = $region8
    $region5: #{tpu_custom_call.1} parent=1 // loop_body
      %s21 = ssub.s32 %s16, 1
      %s22 = ssub.s32 %s16, 2
      %s23 = sadd.s32 %s16, 1
      %s25 = sadd.s32 %s24, 1
      %p28 = scmp.eq.s32.totalorder %s16, 1
      %p29 = scmp.ne.s32.totalorder %s24, %s26
      %p30 = scmp.eq.s32.totalorder %s16, 0
      %p31 = por %p29, %p30
      %p32 = scmp.ne.s32.totalorder %s24, %s26
      %p33 = scmp.eq.s32.totalorder %s21, 1
      %p34 = por %p32, %p33
      %p35 = scmp.ne.s32.totalorder %s26, %s27
      %p36 = scmp.eq.s32.totalorder %s21, 0
      %p37 = por %p35, %p36
      %p38 = scmp.ne.s32.totalorder %s26, %s27
      %p39 = scmp.eq.s32.totalorder %s22, 1
      %p40 = por %p38, %p39
      %p42 = scmp.ne.s32.totalorder %s27, %s41
      %p43 = scmp.eq.s32.totalorder %s22, 0
      %p44 = por %p42, %p43
      %s45 = ssub.s32 %s16, %s23
      %p46 = scmp.eq.s32.totalorder %s45, 0
      %s48 = sadd.s32 %s47, 1
      %s49 = scalar_select %p46, %s47, %s48
      %p52 = pneg %p46
      %p53 = scmp.eq.s32.totalorder %s16, 1
      %p54 = por %p52, %p53
      %p55 = scmp.ne.s32.totalorder %s47, %s50
      %p56 = scmp.eq.s32.totalorder %s16, 0
      %p57 = por %p55, %p56
      %p58 = scmp.ne.s32.totalorder %s47, %s50
      %p59 = scmp.eq.s32.totalorder %s21, 1
      %p60 = por %p58, %p59
      %p61 = scmp.ne.s32.totalorder %s50, %s51
      %p62 = scmp.eq.s32.totalorder %s21, 0
      %p63 = por %p61, %p62
      %p64 = scmp.ne.s32.totalorder %s50, %s51
      %p65 = scmp.eq.s32.totalorder %s22, 1
      %p66 = por %p64, %p65
      %p68 = scmp.ne.s32.totalorder %s51, %s67
      %p69 = scmp.eq.s32.totalorder %s22, 0
      %p70 = por %p68, %p69
      %s72 = sadd.s32 %s71, 1
      %p75 = scmp.eq.s32.totalorder %s16, 1
      %p76 = scmp.ne.s32.totalorder %s71, %s73
      %p77 = scmp.eq.s32.totalorder %s16, 0
      %p78 = por %p76, %p77
      %p79 = scmp.ne.s32.totalorder %s71, %s73
      %p80 = scmp.eq.s32.totalorder %s21, 1
      %p81 = por %p79, %p80
      %p82 = scmp.ne.s32.totalorder %s73, %s74
      %p83 = scmp.eq.s32.totalorder %s21, 0
      %p84 = por %p82, %p83
      %p85 = scmp.ne.s32.totalorder %s73, %s74
      %p86 = scmp.eq.s32.totalorder %s22, 1
      %p87 = por %p85, %p86
      %p89 = scmp.ne.s32.totalorder %s74, %s88
      %p90 = scmp.eq.s32.totalorder %s22, 0
      %p91 = por %p89, %p90
      %s92 = ssub.s32 %s16, %s23
      %p93 = scmp.eq.s32.totalorder %s92, 0
      %s95 = sadd.s32 %s94, 1
      %s96 = scalar_select %p93, %s94, %s95
      %p99 = pneg %p93
      %p100 = scmp.eq.s32.totalorder %s16, 1
      %p101 = por %p99, %p100
      %p102 = scmp.ne.s32.totalorder %s94, %s97
      %p103 = scmp.eq.s32.totalorder %s16, 0
      %p104 = por %p102, %p103
      %p105 = scmp.ne.s32.totalorder %s94, %s97
      %p106 = scmp.eq.s32.totalorder %s21, 1
      %p107 = por %p105, %p106
      %p108 = scmp.ne.s32.totalorder %s97, %s98
      %p109 = scmp.eq.s32.totalorder %s21, 0
      %p110 = por %p108, %p109
      %p111 = scmp.ne.s32.totalorder %s97, %s98
      %p112 = scmp.eq.s32.totalorder %s22, 1
      %p113 = por %p111, %p112
      %p115 = scmp.ne.s32.totalorder %s98, %s114
      %p116 = scmp.eq.s32.totalorder %s22, 0
      %p117 = por %p115, %p116
      %p118 = scmp.le.s32.totalorder 1, %s16
      %p119 = scmp.lt.s32.totalorder %s16, 3
      %p120 = pnand %p118, %p119
      %p121 = pneg %p120
      // Predicated region
      $region9: #{tpu_custom_call.1} parent=5 // pred_check
        _
      $region10: #{tpu_custom_call.1} parent=5 // pred_check_branch
        %123 = sbr.rel (%p120) target = $region12
      $region11: #{tpu_custom_call.1} parent=5 // pred_region
        %s124 = ssub.s32 %s16, 1
        // Predicated region
        $region13: #{tpu_custom_call.1} parent=11 // pred_check
          %p125 = pneg %p37
        $region14: #{tpu_custom_call.1} parent=11 // pred_check_branch
          %127 = sbr.rel (%p125) target = $region16
        $region15: #{tpu_custom_call.1} parent=11 // pred_region
          %s129 = ssub.s32 4096, 4096
          %130 = vsyncadd [#allocation3], %s129
          %s131 = sshll.u32 [#allocation2], 4
          %s132 = int_to_ptr.vmem [resolvable:$true] %s131
          %137 = dma.hbm_to_vmem [thread:$0]  %s0, 4096, %s132, [#allocation3], 128, 128, 8
        $region16: #{tpu_custom_call.1} parent=11 // pred_fallthru
          _
        // Predicated region
        $region17: #{tpu_custom_call.1} parent=11 // pred_check
          %p138 = pneg %p84
        $region18: #{tpu_custom_call.1} parent=11 // pred_check_branch
          %140 = sbr.rel (%p138) target = $region20
        $region19: #{tpu_custom_call.1} parent=11 // pred_region
          %s142 = ssub.s32 128, 128
          %143 = vsyncadd [#allocation6], %s142
          %s145 = sshll.u32 [#allocation7], 4
          %s146 = int_to_ptr.vmem [resolvable:$true] %s145
          %148 = dma.hbm_to_vmem [thread:$0]  %s2, 128, %s146, [#allocation6]
        $region20: #{tpu_custom_call.1} parent=11 // pred_fallthru
          _
      $region12: #{tpu_custom_call.1} parent=5 // pred_fallthru
        _
      %p149 = scmp.lt.s32.totalorder %s16, 2
      // Predicated region
      $region21: #{tpu_custom_call.1} parent=5 // pred_check
        %p150 = pneg %p149
      $region22: #{tpu_custom_call.1} parent=5 // pred_check_branch
        %152 = sbr.rel (%p150) target = $region24
      $region23: #{tpu_custom_call.1} parent=5 // pred_region
        // Predicated region
        $region25: #{tpu_custom_call.1} parent=23 // pred_check
          %p153 = pneg %p57
        $region26: #{tpu_custom_call.1} parent=23 // pred_check_branch
          %155 = sbr.rel (%p153) target = $region28
        $region27: #{tpu_custom_call.1} parent=23 // pred_region
          %s156 = sand.u32 %s16, 1
          %s157 = scalar_lea.sflag [#allocation6], %s156
          %s158 = sand.u32 %s47, 1
          %s159 = smul.addr %s158, 256
          %s160 = scalar_lea.vmem [#allocation5], %s159
          %s161 = smul.u32 2, %s16
          %s163 = ssub.s32 4096, 4096
          %164 = vsyncadd %s157, %s163
          %s165 = smul.addr %s161, 64
          %s166 = scalar_lea.hbm %s1, %s165
          %s167 = sshll.u32 %s160, 4
          %s168 = int_to_ptr.vmem [resolvable:$true] %s167
          %173 = dma.hbm_to_vmem [thread:$0]  %s166, 4096, %s168, %s157, 256, 128, 8
        $region28: #{tpu_custom_call.1} parent=23 // pred_fallthru
          _
      $region24: #{tpu_custom_call.1} parent=5 // pred_fallthru
        _
      %p174 = scmp.le.s32.totalorder 1, %s16
      %p175 = scmp.lt.s32.totalorder %s16, 3
      %p176 = pnand %p174, %p175
      %p177 = pneg %p176
      // Predicated region
      $region29: #{tpu_custom_call.1} parent=5 // pred_check
        _
      $region30: #{tpu_custom_call.1} parent=5 // pred_check_branch
        %179 = sbr.rel (%p176) target = $region32
      $region31: #{tpu_custom_call.1} parent=5 // pred_region
        %s180 = ssub.s32 %s16, 1
        // Predicated region
        $region33: #{tpu_custom_call.1} parent=31 // pred_check
          %p181 = pneg %p37
        $region34: #{tpu_custom_call.1} parent=31 // pred_check_branch
          %183 = sbr.rel (%p181) target = $region36
        $region35: #{tpu_custom_call.1} parent=31 // pred_region
          %184 = dma.done [#allocation3], 4096
        $region36: #{tpu_custom_call.1} parent=31 // pred_fallthru
          _
        %s185 = sand.u32 %s21, 1
        %s186 = scalar_lea.sflag [#allocation6], %s185
        %s187 = sand.u32 %s50, 1
        %s188 = smul.addr %s187, 256
        %s189 = scalar_lea.vmem [#allocation5], %s188
        // Predicated region
        $region37: #{tpu_custom_call.1} parent=31 // pred_check
          %p190 = pneg %p63
        $region38: #{tpu_custom_call.1} parent=31 // pred_check_branch
          %192 = sbr.rel (%p190) target = $region40
        $region39: #{tpu_custom_call.1} parent=31 // pred_region
          %193 = dma.done %s186, 4096
        $region40: #{tpu_custom_call.1} parent=31 // pred_fallthru
          _
        // Predicated region
        $region41: #{tpu_custom_call.1} parent=31 // pred_check
          %p194 = pneg %p84
        $region42: #{tpu_custom_call.1} parent=31 // pred_check_branch
          %196 = sbr.rel (%p194) target = $region44
        $region43: #{tpu_custom_call.1} parent=31 // pred_region
          %197 = dma.done [#allocation6], 128
        $region44: #{tpu_custom_call.1} parent=31 // pred_fallthru
          _
        %p198 = pneg %p37
        %p199 = pneg %p34
        %s200 = sand.u32 %s21, 1
        %s201 = scalar_lea.sflag [#allocation6], %s200
        %s202 = sand.u32 %s50, 1
        %s203 = smul.addr %s202, 256
        %s204 = scalar_lea.vmem [#allocation5], %s203
        %p205 = pneg %p63
        %p206 = pneg %p60
        %p207 = pneg %p84
        %p208 = pneg %p81
        %p209 = pneg %p110
        %p210 = pneg %p107
        %s211 = sand.u32 %s97, 1
        %s212 = scalar_lea.sflag [#allocation4], %s211
        %s213 = sand.u32 %s97, 1
        %s214 = smul.addr %s213, 256
        %s215 = scalar_lea.vmem [#allocation8], %s214
        %s216 = smul.u32 2, %s21
        %s217 = smul.u32 2, %s21
        %v218 = vld [vmem:[#allocation2] sm:$0xff]
        %v219 = vld [vmem:[#allocation2 + $0x8] sm:$0xff]
        %v220 = vld [vmem:[#allocation2 + $0x10] sm:$0xff]
        %v221 = vld [vmem:[#allocation2 + $0x18] sm:$0xff]
        %v222 = vld [vmem:[#allocation2 + $0x20] sm:$0xff]
        %v223 = vld [vmem:[#allocation2 + $0x28] sm:$0xff]
        %v224 = vld [vmem:[#allocation2 + $0x30] sm:$0xff]
        %v225 = vld [vmem:[#allocation2 + $0x38] sm:$0xff]
        %v226 = vld [vmem:[#allocation2 + $0x40] sm:$0xff]
        %v227 = vld [vmem:[#allocation2 + $0x48] sm:$0xff]
        %v228 = vld [vmem:[#allocation2 + $0x50] sm:$0xff]
        %v229 = vld [vmem:[#allocation2 + $0x58] sm:$0xff]
        %v230 = vld [vmem:[#allocation2 + $0x60] sm:$0xff]
        %v231 = vld [vmem:[#allocation2 + $0x68] sm:$0xff]
        %v232 = vld [vmem:[#allocation2 + $0x70] sm:$0xff]
        %v233 = vld [vmem:[#allocation2 + $0x78] sm:$0xff]
        %v234 = vld [vmem:[#allocation2 + $0x80] sm:$0xff]
        %v235 = vld [vmem:[#allocation2 + $0x88] sm:$0xff]
        %v236 = vld [vmem:[#allocation2 + $0x90] sm:$0xff]
        %v237 = vld [vmem:[#allocation2 + $0x98] sm:$0xff]
        %v238 = vld [vmem:[#allocation2 + $0xa0] sm:$0xff]
        %v239 = vld [vmem:[#allocation2 + $0xa8] sm:$0xff]
        %v240 = vld [vmem:[#allocation2 + $0xb0] sm:$0xff]
        %v241 = vld [vmem:[#allocation2 + $0xb8] sm:$0xff]
        %v242 = vld [vmem:[#allocation2 + $0xc0] sm:$0xff]
        %v243 = vld [vmem:[#allocation2 + $0xc8] sm:$0xff]
        %v244 = vld [vmem:[#allocation2 + $0xd0] sm:$0xff]
        %v245 = vld [vmem:[#allocation2 + $0xd8] sm:$0xff]
        %v246 = vld [vmem:[#allocation2 + $0xe0] sm:$0xff]
        %v247 = vld [vmem:[#allocation2 + $0xe8] sm:$0xff]
        %v248 = vld [vmem:[#allocation2 + $0xf0] sm:$0xff]
        %v249 = vld [vmem:[#allocation2 + $0xf8] sm:$0xff]
        %v250 = vld [vmem:[%s189] sm:$0xff]
        %v251 = vld [vmem:[%s189 + $0x8] sm:$0xff]
        %v252 = vld [vmem:[%s189 + $0x10] sm:$0xff]
        %v253 = vld [vmem:[%s189 + $0x18] sm:$0xff]
        %v254 = vld [vmem:[%s189 + $0x20] sm:$0xff]
        %v255 = vld [vmem:[%s189 + $0x28] sm:$0xff]
        %v256 = vld [vmem:[%s189 + $0x30] sm:$0xff]
        %v257 = vld [vmem:[%s189 + $0x38] sm:$0xff]
        %v258 = vld [vmem:[%s189 + $0x40] sm:$0xff]
        %v259 = vld [vmem:[%s189 + $0x48] sm:$0xff]
        %v260 = vld [vmem:[%s189 + $0x50] sm:$0xff]
        %v261 = vld [vmem:[%s189 + $0x58] sm:$0xff]
        %v262 = vld [vmem:[%s189 + $0x60] sm:$0xff]
        %v263 = vld [vmem:[%s189 + $0x68] sm:$0xff]
        %v264 = vld [vmem:[%s189 + $0x70] sm:$0xff]
        %v265 = vld [vmem:[%s189 + $0x78] sm:$0xff]
        %v266 = vld [vmem:[%s189 + $0x80] sm:$0xff]
        %v267 = vld [vmem:[%s189 + $0x88] sm:$0xff]
        %v268 = vld [vmem:[%s189 + $0x90] sm:$0xff]
        %v269 = vld [vmem:[%s189 + $0x98] sm:$0xff]
        %v270 = vld [vmem:[%s189 + $0xa0] sm:$0xff]
        %v271 = vld [vmem:[%s189 + $0xa8] sm:$0xff]
        %v272 = vld [vmem:[%s189 + $0xb0] sm:$0xff]
        %v273 = vld [vmem:[%s189 + $0xb8] sm:$0xff]
        %v274 = vld [vmem:[%s189 + $0xc0] sm:$0xff]
        %v275 = vld [vmem:[%s189 + $0xc8] sm:$0xff]
        %v276 = vld [vmem:[%s189 + $0xd0] sm:$0xff]
        %v277 = vld [vmem:[%s189 + $0xd8] sm:$0xff]
        %v278 = vld [vmem:[%s189 + $0xe0] sm:$0xff]
        %v279 = vld [vmem:[%s189 + $0xe8] sm:$0xff]
        %v280 = vld [vmem:[%s189 + $0xf0] sm:$0xff]
        %v281 = vld [vmem:[%s189 + $0xf8] sm:$0xff]
        %v314 = vunpack.c.l.b16 %v218
        %v315 = vunpack.c.h.b16 %v218
        %v316 = vunpack.c.l.b16 %v219
        %v317 = vunpack.c.h.b16 %v219
        %v318 = vunpack.c.l.b16 %v220
        %v319 = vunpack.c.h.b16 %v220
        %v320 = vunpack.c.l.b16 %v221
        %v321 = vunpack.c.h.b16 %v221
        %v322 = vunpack.c.l.b16 %v222
        %v323 = vunpack.c.h.b16 %v222
        %v324 = vunpack.c.l.b16 %v223
        %v325 = vunpack.c.h.b16 %v223
        %v326 = vunpack.c.l.b16 %v224
        %v327 = vunpack.c.h.b16 %v224
        %v328 = vunpack.c.l.b16 %v225
        %v329 = vunpack.c.h.b16 %v225
        %v330 = vunpack.c.l.b16 %v226
        %v331 = vunpack.c.h.b16 %v226
        %v332 = vunpack.c.l.b16 %v227
        %v333 = vunpack.c.h.b16 %v227
        %v334 = vunpack.c.l.b16 %v228
        %v335 = vunpack.c.h.b16 %v228
        %v336 = vunpack.c.l.b16 %v229
        %v337 = vunpack.c.h.b16 %v229
        %v338 = vunpack.c.l.b16 %v230
        %v339 = vunpack.c.h.b16 %v230
        %v340 = vunpack.c.l.b16 %v231
        %v341 = vunpack.c.h.b16 %v231
        %v342 = vunpack.c.l.b16 %v232
        %v343 = vunpack.c.h.b16 %v232
        %v344 = vunpack.c.l.b16 %v233
        %v345 = vunpack.c.h.b16 %v233
        %v346 = vunpack.c.l.b16 %v234
        %v347 = vunpack.c.h.b16 %v234
        %v348 = vunpack.c.l.b16 %v235
        %v349 = vunpack.c.h.b16 %v235
        %v350 = vunpack.c.l.b16 %v236
        %v351 = vunpack.c.h.b16 %v236
        %v352 = vunpack.c.l.b16 %v237
        %v353 = vunpack.c.h.b16 %v237
        %v354 = vunpack.c.l.b16 %v238
        %v355 = vunpack.c.h.b16 %v238
        %v356 = vunpack.c.l.b16 %v239
        %v357 = vunpack.c.h.b16 %v239
        %v358 = vunpack.c.l.b16 %v240
        %v359 = vunpack.c.h.b16 %v240
        %v360 = vunpack.c.l.b16 %v241
        %v361 = vunpack.c.h.b16 %v241
        %v362 = vunpack.c.l.b16 %v242
        %v363 = vunpack.c.h.b16 %v242
        %v364 = vunpack.c.l.b16 %v243
        %v365 = vunpack.c.h.b16 %v243
        %v366 = vunpack.c.l.b16 %v244
        %v367 = vunpack.c.h.b16 %v244
        %v368 = vunpack.c.l.b16 %v245
        %v369 = vunpack.c.h.b16 %v245
        %v370 = vunpack.c.l.b16 %v246
        %v371 = vunpack.c.h.b16 %v246
        %v372 = vunpack.c.l.b16 %v247
        %v373 = vunpack.c.h.b16 %v247
        %v374 = vunpack.c.l.b16 %v248
        %v375 = vunpack.c.h.b16 %v248
        %v376 = vunpack.c.l.b16 %v249
        %v377 = vunpack.c.h.b16 %v249
        %v378 = vpack.c.b16 %v316, %v314
        %v379 = vpack.c.b16 %v317, %v315
        %v380 = vpack.c.b16 %v320, %v318
        %v381 = vpack.c.b16 %v321, %v319
        %v382 = vpack.c.b16 %v324, %v322
        %v383 = vpack.c.b16 %v325, %v323
        %v384 = vpack.c.b16 %v328, %v326
        %v385 = vpack.c.b16 %v329, %v327
        %v386 = vpack.c.b16 %v332, %v330
        %v387 = vpack.c.b16 %v333, %v331
        %v388 = vpack.c.b16 %v336, %v334
        %v389 = vpack.c.b16 %v337, %v335
        %v390 = vpack.c.b16 %v340, %v338
        %v391 = vpack.c.b16 %v341, %v339
        %v392 = vpack.c.b16 %v344, %v342
        %v393 = vpack.c.b16 %v345, %v343
        %v394 = vpack.c.b16 %v348, %v346
        %v395 = vpack.c.b16 %v349, %v347
        %v396 = vpack.c.b16 %v352, %v350
        %v397 = vpack.c.b16 %v353, %v351
        %v398 = vpack.c.b16 %v356, %v354
        %v399 = vpack.c.b16 %v357, %v355
        %v400 = vpack.c.b16 %v360, %v358
        %v401 = vpack.c.b16 %v361, %v359
        %v402 = vpack.c.b16 %v364, %v362
        %v403 = vpack.c.b16 %v365, %v363
        %v404 = vpack.c.b16 %v368, %v366
        %v405 = vpack.c.b16 %v369, %v367
        %v406 = vpack.c.b16 %v372, %v370
        %v407 = vpack.c.b16 %v373, %v371
        %v408 = vpack.c.b16 %v376, %v374
        %v409 = vpack.c.b16 %v377, %v375
        %v474 = vunpack.c.l.b16 %v250
        %v475 = vunpack.c.h.b16 %v250
        %v476 = vunpack.c.l.b16 %v251
        %v477 = vunpack.c.h.b16 %v251
        %v478 = vunpack.c.l.b16 %v252
        %v479 = vunpack.c.h.b16 %v252
        %v480 = vunpack.c.l.b16 %v253
        %v481 = vunpack.c.h.b16 %v253
        %v482 = vunpack.c.l.b16 %v254
        %v483 = vunpack.c.h.b16 %v254
        %v484 = vunpack.c.l.b16 %v255
        %v485 = vunpack.c.h.b16 %v255
        %v486 = vunpack.c.l.b16 %v256
        %v487 = vunpack.c.h.b16 %v256
        %v488 = vunpack.c.l.b16 %v257
        %v489 = vunpack.c.h.b16 %v257
        %v490 = vunpack.c.l.b16 %v258
        %v491 = vunpack.c.h.b16 %v258
        %v492 = vunpack.c.l.b16 %v259
        %v493 = vunpack.c.h.b16 %v259
        %v494 = vunpack.c.l.b16 %v260
        %v495 = vunpack.c.h.b16 %v260
        %v496 = vunpack.c.l.b16 %v261
        %v497 = vunpack.c.h.b16 %v261
        %v498 = vunpack.c.l.b16 %v262
        %v499 = vunpack.c.h.b16 %v262
        %v500 = vunpack.c.l.b16 %v263
        %v501 = vunpack.c.h.b16 %v263
        %v502 = vunpack.c.l.b16 %v264
        %v503 = vunpack.c.h.b16 %v264
        %v504 = vunpack.c.l.b16 %v265
        %v505 = vunpack.c.h.b16 %v265
        %v506 = vunpack.c.l.b16 %v266
        %v507 = vunpack.c.h.b16 %v266
        %v508 = vunpack.c.l.b16 %v267
        %v509 = vunpack.c.h.b16 %v267
        %v510 = vunpack.c.l.b16 %v268
        %v511 = vunpack.c.h.b16 %v268
        %v512 = vunpack.c.l.b16 %v269
        %v513 = vunpack.c.h.b16 %v269
        %v514 = vunpack.c.l.b16 %v270
        %v515 = vunpack.c.h.b16 %v270
        %v516 = vunpack.c.l.b16 %v271
        %v517 = vunpack.c.h.b16 %v271
        %v518 = vunpack.c.l.b16 %v272
        %v519 = vunpack.c.h.b16 %v272
        %v520 = vunpack.c.l.b16 %v273
        %v521 = vunpack.c.h.b16 %v273
        %v522 = vunpack.c.l.b16 %v274
        %v523 = vunpack.c.h.b16 %v274
        %v524 = vunpack.c.l.b16 %v275
        %v525 = vunpack.c.h.b16 %v275
        %v526 = vunpack.c.l.b16 %v276
        %v527 = vunpack.c.h.b16 %v276
        %v528 = vunpack.c.l.b16 %v277
        %v529 = vunpack.c.h.b16 %v277
        %v530 = vunpack.c.l.b16 %v278
        %v531 = vunpack.c.h.b16 %v278
        %v532 = vunpack.c.l.b16 %v279
        %v533 = vunpack.c.h.b16 %v279
        %v534 = vunpack.c.l.b16 %v280
        %v535 = vunpack.c.h.b16 %v280
        %v536 = vunpack.c.l.b16 %v281
        %v537 = vunpack.c.h.b16 %v281
        %v538 = vpack.c.b16 %v476, %v474
        %v539 = vpack.c.b16 %v477, %v475
        %v540 = vpack.c.b16 %v480, %v478
        %v541 = vpack.c.b16 %v481, %v479
        %v542 = vpack.c.b16 %v484, %v482
        %v543 = vpack.c.b16 %v485, %v483
        %v544 = vpack.c.b16 %v488, %v486
        %v545 = vpack.c.b16 %v489, %v487
        %v546 = vpack.c.b16 %v492, %v490
        %v547 = vpack.c.b16 %v493, %v491
        %v548 = vpack.c.b16 %v496, %v494
        %v549 = vpack.c.b16 %v497, %v495
        %v550 = vpack.c.b16 %v500, %v498
        %v551 = vpack.c.b16 %v501, %v499
        %v552 = vpack.c.b16 %v504, %v502
        %v553 = vpack.c.b16 %v505, %v503
        %v554 = vpack.c.b16 %v508, %v506
        %v555 = vpack.c.b16 %v509, %v507
        %v556 = vpack.c.b16 %v512, %v510
        %v557 = vpack.c.b16 %v513, %v511
        %v558 = vpack.c.b16 %v516, %v514
        %v559 = vpack.c.b16 %v517, %v515
        %v560 = vpack.c.b16 %v520, %v518
        %v561 = vpack.c.b16 %v521, %v519
        %v562 = vpack.c.b16 %v524, %v522
        %v563 = vpack.c.b16 %v525, %v523
        %v564 = vpack.c.b16 %v528, %v526
        %v565 = vpack.c.b16 %v529, %v527
        %v566 = vpack.c.b16 %v532, %v530
        %v567 = vpack.c.b16 %v533, %v531
        %v568 = vpack.c.b16 %v536, %v534
        %v569 = vpack.c.b16 %v537, %v535
        %602 = vmatprep.subr.bf16.mxu0 %v539
        %603 = vmatpush1.bf16.msra.mxu0 %v538
        %604 = vmatprep.subr.bf16.mxu0 %v541
        %605 = vmatpush1.bf16.msra.mxu0 %v540
        %606 = vmatprep.subr.bf16.mxu0 %v543
        %607 = vmatpush1.bf16.msra.mxu0 %v542
        %608 = vmatprep.subr.bf16.mxu0 %v545
        %609 = vmatpush1.bf16.msra.mxu0 %v544
        %610 = vmatprep.subr.bf16.mxu0 %v547
        %611 = vmatpush1.bf16.msra.mxu0 %v546
        %612 = vmatprep.subr.bf16.mxu0 %v549
        %613 = vmatpush1.bf16.msra.mxu0 %v548
        %614 = vmatprep.subr.bf16.mxu0 %v551
        %615 = vmatpush1.bf16.msra.mxu0 %v550
        %616 = vmatprep.subr.bf16.mxu0 %v553
        %617 = vmatpush1.bf16.msra.mxu0 %v552
        %618 = vmatprep.subr.bf16.mxu0 %v555
        %619 = vmatpush1.bf16.msra.mxu0 %v554
        %620 = vmatprep.subr.bf16.mxu0 %v557
        %621 = vmatpush1.bf16.msra.mxu0 %v556
        %622 = vmatprep.subr.bf16.mxu0 %v559
        %623 = vmatpush1.bf16.msra.mxu0 %v558
        %624 = vmatprep.subr.bf16.mxu0 %v561
        %625 = vmatpush1.bf16.msra.mxu0 %v560
        %626 = vmatprep.subr.bf16.mxu0 %v563
        %627 = vmatpush1.bf16.msra.mxu0 %v562
        %628 = vmatprep.subr.bf16.mxu0 %v565
        %629 = vmatpush1.bf16.msra.mxu0 %v564
        %630 = vmatprep.subr.bf16.mxu0 %v567
        %631 = vmatpush1.bf16.msra.mxu0 %v566
        %632 = vmatprep.subr.bf16.mxu0 %v569
        %633 = vmatpush1.bf16.msra.mxu0 %v568
        %634 = vmatprep.mubr.bf16.mxu0 %v379
        %635 = vmatmul.mubr.bf16.gmra.mrb[0].mxu0 %v378
        %v636 = vpop.f32.mrb[0].mxu0
        %v637 = vadd.f32 0.0, %v636
        %v638 = vpop.f32.mrb[0].mxu0
        %v639 = vadd.f32 0.0, %v638
        %v640 = vpop.f32.mrb[0].mxu0
        %v641 = vadd.f32 0.0, %v640
        %v642 = vpop.f32.mrb[0].mxu0
        %v643 = vadd.f32 0.0, %v642
        %644 = vmatprep.mubr.bf16.mxu0 %v381
        %645 = vmatmul.mubr.bf16.gmra.mrb[0].mxu0 %v380
        %v646 = vpop.f32.mrb[0].mxu0
        %v647 = vadd.f32 0.0, %v646
        %v648 = vpop.f32.mrb[0].mxu0
        %v649 = vadd.f32 0.0, %v648
        %v650 = vpop.f32.mrb[0].mxu0
        %v651 = vadd.f32 0.0, %v650
        %v652 = vpop.f32.mrb[0].mxu0
        %v653 = vadd.f32 0.0, %v652
        %654 = vmatprep.mubr.bf16.mxu0 %v383
        %655 = vmatmul.mubr.bf16.gmra.mrb[0].mxu0 %v382
        %v656 = vpop.f32.mrb[0].mxu0
        %v657 = vadd.f32 0.0, %v656
        %v658 = vpop.f32.mrb[0].mxu0
        %v659 = vadd.f32 0.0, %v658
        %v660 = vpop.f32.mrb[0].mxu0
        %v661 = vadd.f32 0.0, %v660
        %v662 = vpop.f32.mrb[0].mxu0
        %v663 = vadd.f32 0.0, %v662
        %664 = vmatprep.mubr.bf16.mxu0 %v385
        %665 = vmatmul.mubr.bf16.gmra.mrb[0].mxu0 %v384
        %v666 = vpop.f32.mrb[0].mxu0
        %v667 = vadd.f32 0.0, %v666
        %v668 = vpop.f32.mrb[0].mxu0
        %v669 = vadd.f32 0.0, %v668
        %v670 = vpop.f32.mrb[0].mxu0
        %v671 = vadd.f32 0.0, %v670
        %v672 = vpop.f32.mrb[0].mxu0
        %v673 = vadd.f32 0.0, %v672
        %674 = vmatprep.mubr.bf16.mxu0 %v387
        %675 = vmatmul.mubr.bf16.gmra.mrb[0].mxu0 %v386
        %v676 = vpop.f32.mrb[0].mxu0
        %v677 = vadd.f32 0.0, %v676
        %v678 = vpop.f32.mrb[0].mxu0
        %v679 = vadd.f32 0.0, %v678
        %v680 = vpop.f32.mrb[0].mxu0
        %v681 = vadd.f32 0.0, %v680
        %v682 = vpop.f32.mrb[0].mxu0
        %v683 = vadd.f32 0.0, %v682
        %684 = vmatprep.mubr.bf16.mxu0 %v389
        %685 = vmatmul.mubr.bf16.gmra.mrb[0].mxu0 %v388
        %v686 = vpop.f32.mrb[0].mxu0
        %v687 = vadd.f32 0.0, %v686
        %v688 = vpop.f32.mrb[0].mxu0
        %v689 = vadd.f32 0.0, %v688
        %v690 = vpop.f32.mrb[0].mxu0
        %v691 = vadd.f32 0.0, %v690
        %v692 = vpop.f32.mrb[0].mxu0
        %v693 = vadd.f32 0.0, %v692
        %694 = vmatprep.mubr.bf16.mxu0 %v391
        %695 = vmatmul.mubr.bf16.gmra.mrb[0].mxu0 %v390
        %v696 = vpop.f32.mrb[0].mxu0
        %v697 = vadd.f32 0.0, %v696
        %v698 = vpop.f32.mrb[0].mxu0
        %v699 = vadd.f32 0.0, %v698
        %v700 = vpop.f32.mrb[0].mxu0
        %v701 = vadd.f32 0.0, %v700
        %v702 = vpop.f32.mrb[0].mxu0
        %v703 = vadd.f32 0.0, %v702
        %704 = vmatprep.mubr.bf16.mxu0 %v393
        %705 = vmatmul.mubr.bf16.gmra.mrb[0].mxu0 %v392
        %v706 = vpop.f32.mrb[0].mxu0
        %v707 = vadd.f32 0.0, %v706
        %v708 = vpop.f32.mrb[0].mxu0
        %v709 = vadd.f32 0.0, %v708
        %v710 = vpop.f32.mrb[0].mxu0
        %v711 = vadd.f32 0.0, %v710
        %v712 = vpop.f32.mrb[0].mxu0
        %v713 = vadd.f32 0.0, %v712
        %714 = vmatprep.mubr.bf16.mxu0 %v395
        %715 = vmatmul.mubr.bf16.gmra.mrb[0].mxu0 %v394
        %v716 = vpop.f32.mrb[0].mxu0
        %v717 = vadd.f32 0.0, %v716
        %v718 = vpop.f32.mrb[0].mxu0
        %v719 = vadd.f32 0.0, %v718
        %v720 = vpop.f32.mrb[0].mxu0
        %v721 = vadd.f32 0.0, %v720
        %v722 = vpop.f32.mrb[0].mxu0
        %v723 = vadd.f32 0.0, %v722
        %724 = vmatprep.mubr.bf16.mxu0 %v397
        %725 = vmatmul.mubr.bf16.gmra.mrb[0].mxu0 %v396
        %v726 = vpop.f32.mrb[0].mxu0
        %v727 = vadd.f32 0.0, %v726
        %v728 = vpop.f32.mrb[0].mxu0
        %v729 = vadd.f32 0.0, %v728
        %v730 = vpop.f32.mrb[0].mxu0
        %v731 = vadd.f32 0.0, %v730
        %v732 = vpop.f32.mrb[0].mxu0
        %v733 = vadd.f32 0.0, %v732
        %734 = vmatprep.mubr.bf16.mxu0 %v399
        %735 = vmatmul.mubr.bf16.gmra.mrb[0].mxu0 %v398
        %v736 = vpop.f32.mrb[0].mxu0
        %v737 = vadd.f32 0.0, %v736
        %v738 = vpop.f32.mrb[0].mxu0
        %v739 = vadd.f32 0.0, %v738
        %v740 = vpop.f32.mrb[0].mxu0
        %v741 = vadd.f32 0.0, %v740
        %v742 = vpop.f32.mrb[0].mxu0
        %v743 = vadd.f32 0.0, %v742
        %744 = vmatprep.mubr.bf16.mxu0 %v401
        %745 = vmatmul.mubr.bf16.gmra.mrb[0].mxu0 %v400
        %v746 = vpop.f32.mrb[0].mxu0
        %v747 = vadd.f32 0.0, %v746
        %v748 = vpop.f32.mrb[0].mxu0
        %v749 = vadd.f32 0.0, %v748
        %v750 = vpop.f32.mrb[0].mxu0
        %v751 = vadd.f32 0.0, %v750
        %v752 = vpop.f32.mrb[0].mxu0
        %v753 = vadd.f32 0.0, %v752
        %754 = vmatprep.mubr.bf16.mxu0 %v403
        %755 = vmatmul.mubr.bf16.gmra.mrb[0].mxu0 %v402
        %v756 = vpop.f32.mrb[0].mxu0
        %v757 = vadd.f32 0.0, %v756
        %v758 = vpop.f32.mrb[0].mxu0
        %v759 = vadd.f32 0.0, %v758
        %v760 = vpop.f32.mrb[0].mxu0
        %v761 = vadd.f32 0.0, %v760
        %v762 = vpop.f32.mrb[0].mxu0
        %v763 = vadd.f32 0.0, %v762
        %764 = vmatprep.mubr.bf16.mxu0 %v405
        %765 = vmatmul.mubr.bf16.gmra.mrb[0].mxu0 %v404
        %v766 = vpop.f32.mrb[0].mxu0
        %v767 = vadd.f32 0.0, %v766
        %v768 = vpop.f32.mrb[0].mxu0
        %v769 = vadd.f32 0.0, %v768
        %v770 = vpop.f32.mrb[0].mxu0
        %v771 = vadd.f32 0.0, %v770
        %v772 = vpop.f32.mrb[0].mxu0
        %v773 = vadd.f32 0.0, %v772
        %774 = vmatprep.mubr.bf16.mxu0 %v407
        %775 = vmatmul.mubr.bf16.gmra.mrb[0].mxu0 %v406
        %v776 = vpop.f32.mrb[0].mxu0
        %v777 = vadd.f32 0.0, %v776
        %v778 = vpop.f32.mrb[0].mxu0
        %v779 = vadd.f32 0.0, %v778
        %v780 = vpop.f32.mrb[0].mxu0
        %v781 = vadd.f32 0.0, %v780
        %v782 = vpop.f32.mrb[0].mxu0
        %v783 = vadd.f32 0.0, %v782
        %784 = vmatprep.mubr.bf16.mxu0 %v409
        %785 = vmatmul.mubr.bf16.gmra.mrb[0].mxu0 %v408
        %v786 = vpop.f32.mrb[0].mxu0
        %v787 = vadd.f32 0.0, %v786
        %v788 = vpop.f32.mrb[0].mxu0
        %v789 = vadd.f32 0.0, %v788
        %v790 = vpop.f32.mrb[0].mxu0
        %v791 = vadd.f32 0.0, %v790
        %v792 = vpop.f32.mrb[0].mxu0
        %v793 = vadd.f32 0.0, %v792
        %794 = vdwg.mxu0
        %v795 = vadd.f32 %v637, %v641
        %v796 = vadd.f32 %v795, %v647
        %v797 = vadd.f32 %v796, %v651
        %v798 = vadd.f32 %v797, %v657
        %v799 = vadd.f32 %v798, %v661
        %v800 = vadd.f32 %v799, %v667
        %v801 = vadd.f32 %v800, %v671
        %v802 = vadd.f32 %v801, %v677
        %v803 = vadd.f32 %v802, %v681
        %v804 = vadd.f32 %v803, %v687
        %v805 = vadd.f32 %v804, %v691
        %v806 = vadd.f32 %v805, %v697
        %v807 = vadd.f32 %v806, %v701
        %v808 = vadd.f32 %v807, %v707
        %v809 = vadd.f32 %v808, %v711
        %v810 = vadd.f32 %v809, %v717
        %v811 = vadd.f32 %v810, %v721
        %v812 = vadd.f32 %v811, %v727
        %v813 = vadd.f32 %v812, %v731
        %v814 = vadd.f32 %v813, %v737
        %v815 = vadd.f32 %v814, %v741
        %v816 = vadd.f32 %v815, %v747
        %v817 = vadd.f32 %v816, %v751
        %v818 = vadd.f32 %v817, %v757
        %v819 = vadd.f32 %v818, %v761
        %v820 = vadd.f32 %v819, %v767
        %v821 = vadd.f32 %v820, %v771
        %v822 = vadd.f32 %v821, %v777
        %v823 = vadd.f32 %v822, %v781
        %v824 = vadd.f32 %v823, %v787
        %v825 = vadd.f32 %v824, %v791
        %v826 = vrot.slane %v825, 4
        %v827 = vadd.f32 %v825, %v826
        %v828 = vrot.slane %v827, 2
        %v829 = vadd.f32 %v827, %v828
        %v830 = vrot.slane %v829, 1
        %v831 = vadd.f32 %v829, %v830
        %v832 = vadd.f32 %v639, %v643
        %v833 = vadd.f32 %v832, %v649
        %v834 = vadd.f32 %v833, %v653
        %v835 = vadd.f32 %v834, %v659
        %v836 = vadd.f32 %v835, %v663
        %v837 = vadd.f32 %v836, %v669
        %v838 = vadd.f32 %v837, %v673
        %v839 = vadd.f32 %v838, %v679
        %v840 = vadd.f32 %v839, %v683
        %v841 = vadd.f32 %v840, %v689
        %v842 = vadd.f32 %v841, %v693
        %v843 = vadd.f32 %v842, %v699
        %v844 = vadd.f32 %v843, %v703
        %v845 = vadd.f32 %v844, %v709
        %v846 = vadd.f32 %v845, %v713
        %v847 = vadd.f32 %v846, %v719
        %v848 = vadd.f32 %v847, %v723
        %v849 = vadd.f32 %v848, %v729
        %v850 = vadd.f32 %v849, %v733
        %v851 = vadd.f32 %v850, %v739
        %v852 = vadd.f32 %v851, %v743
        %v853 = vadd.f32 %v852, %v749
        %v854 = vadd.f32 %v853, %v753
        %v855 = vadd.f32 %v854, %v759
        %v856 = vadd.f32 %v855, %v763
        %v857 = vadd.f32 %v856, %v769
        %v858 = vadd.f32 %v857, %v773
        %v859 = vadd.f32 %v858, %v779
        %v860 = vadd.f32 %v859, %v783
        %v861 = vadd.f32 %v860, %v789
        %v862 = vadd.f32 %v861, %v793
        %v863 = vrot.slane %v862, 4
        %v864 = vadd.f32 %v862, %v863
        %v865 = vrot.slane %v864, 2
        %v866 = vadd.f32 %v864, %v865
        %v867 = vrot.slane %v866, 1
        %v868 = vadd.f32 %v866, %v867
        %v869 = vmul.f32 %v831, 0.00390625
        %v870 = vmul.f32 %v868, 0.00390625
        %v871 = vsub.f32 %v637, %v869
        %v872 = vsub.f32 %v639, %v870
        %v873 = vsub.f32 %v641, %v869
        %v874 = vsub.f32 %v643, %v870
        %v875 = vsub.f32 %v647, %v869
        %v876 = vsub.f32 %v649, %v870
        %v877 = vsub.f32 %v651, %v869
        %v878 = vsub.f32 %v653, %v870
        %v879 = vsub.f32 %v657, %v869
        %v880 = vsub.f32 %v659, %v870
        %v881 = vsub.f32 %v661, %v869
        %v882 = vsub.f32 %v663, %v870
        %v883 = vsub.f32 %v667, %v869
        %v884 = vsub.f32 %v669, %v870
        %v885 = vsub.f32 %v671, %v869
        %v886 = vsub.f32 %v673, %v870
        %v887 = vsub.f32 %v677, %v869
        %v888 = vsub.f32 %v679, %v870
        %v889 = vsub.f32 %v681, %v869
        %v890 = vsub.f32 %v683, %v870
        %v891 = vsub.f32 %v687, %v869
        %v892 = vsub.f32 %v689, %v870
        %v893 = vsub.f32 %v691, %v869
        %v894 = vsub.f32 %v693, %v870
        %v895 = vsub.f32 %v697, %v869
        %v896 = vsub.f32 %v699, %v870
        %v897 = vsub.f32 %v701, %v869
        %v898 = vsub.f32 %v703, %v870
        %v899 = vsub.f32 %v707, %v869
        %v900 = vsub.f32 %v709, %v870
        %v901 = vsub.f32 %v711, %v869
        %v902 = vsub.f32 %v713, %v870
        %v903 = vsub.f32 %v717, %v869
        %v904 = vsub.f32 %v719, %v870
        %v905 = vsub.f32 %v721, %v869
        %v906 = vsub.f32 %v723, %v870
        %v907 = vsub.f32 %v727, %v869
        %v908 = vsub.f32 %v729, %v870
        %v909 = vsub.f32 %v731, %v869
        %v910 = vsub.f32 %v733, %v870
        %v911 = vsub.f32 %v737, %v869
        %v912 = vsub.f32 %v739, %v870
        %v913 = vsub.f32 %v741, %v869
        %v914 = vsub.f32 %v743, %v870
        %v915 = vsub.f32 %v747, %v869
        %v916 = vsub.f32 %v749, %v870
        %v917 = vsub.f32 %v751, %v869
        %v918 = vsub.f32 %v753, %v870
        %v919 = vsub.f32 %v757, %v869
        %v920 = vsub.f32 %v759, %v870
        %v921 = vsub.f32 %v761, %v869
        %v922 = vsub.f32 %v763, %v870
        %v923 = vsub.f32 %v767, %v869
        %v924 = vsub.f32 %v769, %v870
        %v925 = vsub.f32 %v771, %v869
        %v926 = vsub.f32 %v773, %v870
        %v927 = vsub.f32 %v777, %v869
        %v928 = vsub.f32 %v779, %v870
        %v929 = vsub.f32 %v781, %v869
        %v930 = vsub.f32 %v783, %v870
        %v931 = vsub.f32 %v787, %v869
        %v932 = vsub.f32 %v789, %v870
        %v933 = vsub.f32 %v791, %v869
        %v934 = vsub.f32 %v793, %v870
        %v935 = vmul.f32 %v871, %v871
        %v936 = vmul.f32 %v872, %v872
        %v937 = vmul.f32 %v873, %v873
        %v938 = vmul.f32 %v874, %v874
        %v939 = vmul.f32 %v875, %v875
        %v940 = vmul.f32 %v876, %v876
        %v941 = vmul.f32 %v877, %v877
        %v942 = vmul.f32 %v878, %v878
        %v943 = vmul.f32 %v879, %v879
        %v944 = vmul.f32 %v880, %v880
        %v945 = vmul.f32 %v881, %v881
        %v946 = vmul.f32 %v882, %v882
        %v947 = vmul.f32 %v883, %v883
        %v948 = vmul.f32 %v884, %v884
        %v949 = vmul.f32 %v885, %v885
        %v950 = vmul.f32 %v886, %v886
        %v951 = vmul.f32 %v887, %v887
        %v952 = vmul.f32 %v888, %v888
        %v953 = vmul.f32 %v889, %v889
        %v954 = vmul.f32 %v890, %v890
        %v955 = vmul.f32 %v891, %v891
        %v956 = vmul.f32 %v892, %v892
        %v957 = vmul.f32 %v893, %v893
        %v958 = vmul.f32 %v894, %v894
        %v959 = vmul.f32 %v895, %v895
        %v960 = vmul.f32 %v896, %v896
        %v961 = vmul.f32 %v897, %v897
        %v962 = vmul.f32 %v898, %v898
        %v963 = vmul.f32 %v899, %v899
        %v964 = vmul.f32 %v900, %v900
        %v965 = vmul.f32 %v901, %v901
        %v966 = vmul.f32 %v902, %v902
        %v967 = vmul.f32 %v903, %v903
        %v968 = vmul.f32 %v904, %v904
        %v969 = vmul.f32 %v905, %v905
        %v970 = vmul.f32 %v906, %v906
        %v971 = vmul.f32 %v907, %v907
        %v972 = vmul.f32 %v908, %v908
        %v973 = vmul.f32 %v909, %v909
        %v974 = vmul.f32 %v910, %v910
        %v975 = vmul.f32 %v911, %v911
        %v976 = vmul.f32 %v912, %v912
        %v977 = vmul.f32 %v913, %v913
        %v978 = vmul.f32 %v914, %v914
        %v979 = vmul.f32 %v915, %v915
        %v980 = vmul.f32 %v916, %v916
        %v981 = vmul.f32 %v917, %v917
        %v982 = vmul.f32 %v918, %v918
        %v983 = vmul.f32 %v919, %v919
        %v984 = vmul.f32 %v920, %v920
        %v985 = vmul.f32 %v921, %v921
        %v986 = vmul.f32 %v922, %v922
        %v987 = vmul.f32 %v923, %v923
        %v988 = vmul.f32 %v924, %v924
        %v989 = vmul.f32 %v925, %v925
        %v990 = vmul.f32 %v926, %v926
        %v991 = vmul.f32 %v927, %v927
        %v992 = vmul.f32 %v928, %v928
        %v993 = vmul.f32 %v929, %v929
        %v994 = vmul.f32 %v930, %v930
        %v995 = vmul.f32 %v931, %v931
        %v996 = vmul.f32 %v932, %v932
        %v997 = vmul.f32 %v933, %v933
        %v998 = vmul.f32 %v934, %v934
        %v999 = vadd.f32 %v935, %v937
        %v1000 = vadd.f32 %v999, %v939
        %v1001 = vadd.f32 %v1000, %v941
        %v1002 = vadd.f32 %v1001, %v943
        %v1003 = vadd.f32 %v1002, %v945
        %v1004 = vadd.f32 %v1003, %v947
        %v1005 = vadd.f32 %v1004, %v949
        %v1006 = vadd.f32 %v1005, %v951
        %v1007 = vadd.f32 %v1006, %v953
        %v1008 = vadd.f32 %v1007, %v955
        %v1009 = vadd.f32 %v1008, %v957
        %v1010 = vadd.f32 %v1009, %v959
        %v1011 = vadd.f32 %v1010, %v961
        %v1012 = vadd.f32 %v1011, %v963
        %v1013 = vadd.f32 %v1012, %v965
        %v1014 = vadd.f32 %v1013, %v967
        %v1015 = vadd.f32 %v1014, %v969
        %v1016 = vadd.f32 %v1015, %v971
        %v1017 = vadd.f32 %v1016, %v973
        %v1018 = vadd.f32 %v1017, %v975
        %v1019 = vadd.f32 %v1018, %v977
        %v1020 = vadd.f32 %v1019, %v979
        %v1021 = vadd.f32 %v1020, %v981
        %v1022 = vadd.f32 %v1021, %v983
        %v1023 = vadd.f32 %v1022, %v985
        %v1024 = vadd.f32 %v1023, %v987
        %v1025 = vadd.f32 %v1024, %v989
        %v1026 = vadd.f32 %v1025, %v991
        %v1027 = vadd.f32 %v1026, %v993
        %v1028 = vadd.f32 %v1027, %v995
        %v1029 = vadd.f32 %v1028, %v997
        %v1030 = vrot.slane %v1029, 4
        %v1031 = vadd.f32 %v1029, %v1030
        %v1032 = vrot.slane %v1031, 2
        %v1033 = vadd.f32 %v1031, %v1032
        %v1034 = vrot.slane %v1033, 1
        %v1035 = vadd.f32 %v1033, %v1034
        %v1036 = vadd.f32 %v936, %v938
        %v1037 = vadd.f32 %v1036, %v940
        %v1038 = vadd.f32 %v1037, %v942
        %v1039 = vadd.f32 %v1038, %v944
        %v1040 = vadd.f32 %v1039, %v946
        %v1041 = vadd.f32 %v1040, %v948
        %v1042 = vadd.f32 %v1041, %v950
        %v1043 = vadd.f32 %v1042, %v952
        %v1044 = vadd.f32 %v1043, %v954
        %v1045 = vadd.f32 %v1044, %v956
        %v1046 = vadd.f32 %v1045, %v958
        %v1047 = vadd.f32 %v1046, %v960
        %v1048 = vadd.f32 %v1047, %v962
        %v1049 = vadd.f32 %v1048, %v964
        %v1050 = vadd.f32 %v1049, %v966
        %v1051 = vadd.f32 %v1050, %v968
        %v1052 = vadd.f32 %v1051, %v970
        %v1053 = vadd.f32 %v1052, %v972
        %v1054 = vadd.f32 %v1053, %v974
        %v1055 = vadd.f32 %v1054, %v976
        %v1056 = vadd.f32 %v1055, %v978
        %v1057 = vadd.f32 %v1056, %v980
        %v1058 = vadd.f32 %v1057, %v982
        %v1059 = vadd.f32 %v1058, %v984
        %v1060 = vadd.f32 %v1059, %v986
        %v1061 = vadd.f32 %v1060, %v988
        %v1062 = vadd.f32 %v1061, %v990
        %v1063 = vadd.f32 %v1062, %v992
        %v1064 = vadd.f32 %v1063, %v994
        %v1065 = vadd.f32 %v1064, %v996
        %v1066 = vadd.f32 %v1065, %v998
        %v1067 = vrot.slane %v1066, 4
        %v1068 = vadd.f32 %v1066, %v1067
        %v1069 = vrot.slane %v1068, 2
        %v1070 = vadd.f32 %v1068, %v1069
        %v1071 = vrot.slane %v1070, 1
        %v1072 = vadd.f32 %v1070, %v1071
        %v1073 = vmul.f32 %v1035, 0.00390625
        %v1074 = vmul.f32 %v1072, 0.00390625
        %s1075 = smul.u32 %s21, 256
        %s1076 = sshra.s32 %s1075, 7
        %s1077 = sand.u32 %s1075, 127
        %s1078 = smul.addr %s1076, 2
        %s1079 = scalar_lea.vmem [#allocation7], %s1078
        %v1080 = vld [vmem:[%s1079] ss:$2 sm:$0x3]
        %s1081 = scalar_lea.vmem %s1079, 1 [#allocation7]
        %v1082 = vld [vmem:[%s1081] ss:$2 sm:$0x3]
        %v1083 = vadd.f32 %v1073, 1e-05
        %v1084 = vadd.f32 %v1074, 1e-05
        %v1085 = vrsqrt.pop %v1083
        %v1086 = vrsqrt.pop %v1084
        %v1089 = vcombine.low %v1085, %v1086
        %v1091 = vunpack.c.l.s4 1966171168
        %v1092 = vunpack.c.0.s8 %v1091
        %v1093 = vlaneseq
        %v1094 = vshrl.u32 %v1093, 7
        %v1095 = vsub.s32 %v1092, %v1094
        %v1096 = vrot.slane %v1089, %v1095
        %v1098 = vunpack.c.l.s4 1966171168
        %v1099 = vunpack.c.0.s8 %v1098
        %v1100 = vlaneseq
        %v1101 = vshrl.u32 %v1100, 7
        %v1102 = vsub.s32 %v1099, %v1101
        %v1103 = vrot.slane %v1096, %v1102
        %v1105 = vmul.f32 %v1080, %v1103
        %v1107 = vlaneseq
        %v1108 = vshrl.u32 %v1107, 7
        %v1109 = vsub.s32 0, %v1108
        %v1110 = vrot.slane %v1105, %v1109
        %v1111 = vlaneseq
        %v1112 = vshrl.u32 %v1111, 7
        %v1113 = vsub.s32 1, %v1112
        %v1114 = vrot.slane %v1105, %v1113
        %v1117 = vmul.f32 %v871, %v1110
        %v1118 = vmul.f32 %v872, %v1114
        %v1119 = vmul.f32 %v873, %v1110
        %v1120 = vmul.f32 %v874, %v1114
        %v1121 = vmul.f32 %v875, %v1110
        %v1122 = vmul.f32 %v876, %v1114
        %v1123 = vmul.f32 %v877, %v1110
        %v1124 = vmul.f32 %v878, %v1114
        %v1125 = vmul.f32 %v879, %v1110
        %v1126 = vmul.f32 %v880, %v1114
        %v1127 = vmul.f32 %v881, %v1110
        %v1128 = vmul.f32 %v882, %v1114
        %v1129 = vmul.f32 %v883, %v1110
        %v1130 = vmul.f32 %v884, %v1114
        %v1131 = vmul.f32 %v885, %v1110
        %v1132 = vmul.f32 %v886, %v1114
        %v1133 = vmul.f32 %v887, %v1110
        %v1134 = vmul.f32 %v888, %v1114
        %v1135 = vmul.f32 %v889, %v1110
        %v1136 = vmul.f32 %v890, %v1114
        %v1137 = vmul.f32 %v891, %v1110
        %v1138 = vmul.f32 %v892, %v1114
        %v1139 = vmul.f32 %v893, %v1110
        %v1140 = vmul.f32 %v894, %v1114
        %v1141 = vmul.f32 %v895, %v1110
        %v1142 = vmul.f32 %v896, %v1114
        %v1143 = vmul.f32 %v897, %v1110
        %v1144 = vmul.f32 %v898, %v1114
        %v1145 = vmul.f32 %v899, %v1110
        %v1146 = vmul.f32 %v900, %v1114
        %v1147 = vmul.f32 %v901, %v1110
        %v1148 = vmul.f32 %v902, %v1114
        %v1149 = vmul.f32 %v903, %v1110
        %v1150 = vmul.f32 %v904, %v1114
        %v1151 = vmul.f32 %v905, %v1110
        %v1152 = vmul.f32 %v906, %v1114
        %v1153 = vmul.f32 %v907, %v1110
        %v1154 = vmul.f32 %v908, %v1114
        %v1155 = vmul.f32 %v909, %v1110
        %v1156 = vmul.f32 %v910, %v1114
        %v1157 = vmul.f32 %v911, %v1110
        %v1158 = vmul.f32 %v912, %v1114
        %v1159 = vmul.f32 %v913, %v1110
        %v1160 = vmul.f32 %v914, %v1114
        %v1161 = vmul.f32 %v915, %v1110
        %v1162 = vmul.f32 %v916, %v1114
        %v1163 = vmul.f32 %v917, %v1110
        %v1164 = vmul.f32 %v918, %v1114
        %v1165 = vmul.f32 %v919, %v1110
        %v1166 = vmul.f32 %v920, %v1114
        %v1167 = vmul.f32 %v921, %v1110
        %v1168 = vmul.f32 %v922, %v1114
        %v1169 = vmul.f32 %v923, %v1110
        %v1170 = vmul.f32 %v924, %v1114
        %v1171 = vmul.f32 %v925, %v1110
        %v1172 = vmul.f32 %v926, %v1114
        %v1173 = vmul.f32 %v927, %v1110
        %v1174 = vmul.f32 %v928, %v1114
        %v1175 = vmul.f32 %v929, %v1110
        %v1176 = vmul.f32 %v930, %v1114
        %v1177 = vmul.f32 %v931, %v1110
        %v1178 = vmul.f32 %v932, %v1114
        %v1179 = vmul.f32 %v933, %v1110
        %v1180 = vmul.f32 %v934, %v1114
        %v1182 = vlaneseq
        %v1183 = vshrl.u32 %v1182, 7
        %v1184 = vsub.s32 0, %v1183
        %v1185 = vrot.slane %v1082, %v1184
        %v1186 = vlaneseq
        %v1187 = vshrl.u32 %v1186, 7
        %v1188 = vsub.s32 1, %v1187
        %v1189 = vrot.slane %v1082, %v1188
        %v1192 = vadd.f32 %v1117, %v1185
        %v1193 = vadd.f32 %v1118, %v1189
        %v1194 = vadd.f32 %v1119, %v1185
        %v1195 = vadd.f32 %v1120, %v1189
        %v1196 = vadd.f32 %v1121, %v1185
        %v1197 = vadd.f32 %v1122, %v1189
        %v1198 = vadd.f32 %v1123, %v1185
        %v1199 = vadd.f32 %v1124, %v1189
        %v1200 = vadd.f32 %v1125, %v1185
        %v1201 = vadd.f32 %v1126, %v1189
        %v1202 = vadd.f32 %v1127, %v1185
        %v1203 = vadd.f32 %v1128, %v1189
        %v1204 = vadd.f32 %v1129, %v1185
        %v1205 = vadd.f32 %v1130, %v1189
        %v1206 = vadd.f32 %v1131, %v1185
        %v1207 = vadd.f32 %v1132, %v1189
        %v1208 = vadd.f32 %v1133, %v1185
        %v1209 = vadd.f32 %v1134, %v1189
        %v1210 = vadd.f32 %v1135, %v1185
        %v1211 = vadd.f32 %v1136, %v1189
        %v1212 = vadd.f32 %v1137, %v1185
        %v1213 = vadd.f32 %v1138, %v1189
        %v1214 = vadd.f32 %v1139, %v1185
        %v1215 = vadd.f32 %v1140, %v1189
        %v1216 = vadd.f32 %v1141, %v1185
        %v1217 = vadd.f32 %v1142, %v1189
        %v1218 = vadd.f32 %v1143, %v1185
        %v1219 = vadd.f32 %v1144, %v1189
        %v1220 = vadd.f32 %v1145, %v1185
        %v1221 = vadd.f32 %v1146, %v1189
        %v1222 = vadd.f32 %v1147, %v1185
        %v1223 = vadd.f32 %v1148, %v1189
        %v1224 = vadd.f32 %v1149, %v1185
        %v1225 = vadd.f32 %v1150, %v1189
        %v1226 = vadd.f32 %v1151, %v1185
        %v1227 = vadd.f32 %v1152, %v1189
        %v1228 = vadd.f32 %v1153, %v1185
        %v1229 = vadd.f32 %v1154, %v1189
        %v1230 = vadd.f32 %v1155, %v1185
        %v1231 = vadd.f32 %v1156, %v1189
        %v1232 = vadd.f32 %v1157, %v1185
        %v1233 = vadd.f32 %v1158, %v1189
        %v1234 = vadd.f32 %v1159, %v1185
        %v1235 = vadd.f32 %v1160, %v1189
        %v1236 = vadd.f32 %v1161, %v1185
        %v1237 = vadd.f32 %v1162, %v1189
        %v1238 = vadd.f32 %v1163, %v1185
        %v1239 = vadd.f32 %v1164, %v1189
        %v1240 = vadd.f32 %v1165, %v1185
        %v1241 = vadd.f32 %v1166, %v1189
        %v1242 = vadd.f32 %v1167, %v1185
        %v1243 = vadd.f32 %v1168, %v1189
        %v1244 = vadd.f32 %v1169, %v1185
        %v1245 = vadd.f32 %v1170, %v1189
        %v1246 = vadd.f32 %v1171, %v1185
        %v1247 = vadd.f32 %v1172, %v1189
        %v1248 = vadd.f32 %v1173, %v1185
        %v1249 = vadd.f32 %v1174, %v1189
        %v1250 = vadd.f32 %v1175, %v1185
        %v1251 = vadd.f32 %v1176, %v1189
        %v1252 = vadd.f32 %v1177, %v1185
        %v1253 = vadd.f32 %v1178, %v1189
        %v1254 = vadd.f32 %v1179, %v1185
        %v1255 = vadd.f32 %v1180, %v1189
        %v1256 = vmax.f32 %v1192, 0.0
        %v1257 = vmax.f32 %v1193, 0.0
        %v1258 = vmax.f32 %v1194, 0.0
        %v1259 = vmax.f32 %v1195, 0.0
        %v1260 = vmax.f32 %v1196, 0.0
        %v1261 = vmax.f32 %v1197, 0.0
        %v1262 = vmax.f32 %v1198, 0.0
        %v1263 = vmax.f32 %v1199, 0.0
        %v1264 = vmax.f32 %v1200, 0.0
        %v1265 = vmax.f32 %v1201, 0.0
        %v1266 = vmax.f32 %v1202, 0.0
        %v1267 = vmax.f32 %v1203, 0.0
        %v1268 = vmax.f32 %v1204, 0.0
        %v1269 = vmax.f32 %v1205, 0.0
        %v1270 = vmax.f32 %v1206, 0.0
        %v1271 = vmax.f32 %v1207, 0.0
        %v1272 = vmax.f32 %v1208, 0.0
        %v1273 = vmax.f32 %v1209, 0.0
        %v1274 = vmax.f32 %v1210, 0.0
        %v1275 = vmax.f32 %v1211, 0.0
        %v1276 = vmax.f32 %v1212, 0.0
        %v1277 = vmax.f32 %v1213, 0.0
        %v1278 = vmax.f32 %v1214, 0.0
        %v1279 = vmax.f32 %v1215, 0.0
        %v1280 = vmax.f32 %v1216, 0.0
        %v1281 = vmax.f32 %v1217, 0.0
        %v1282 = vmax.f32 %v1218, 0.0
        %v1283 = vmax.f32 %v1219, 0.0
        %v1284 = vmax.f32 %v1220, 0.0
        %v1285 = vmax.f32 %v1221, 0.0
        %v1286 = vmax.f32 %v1222, 0.0
        %v1287 = vmax.f32 %v1223, 0.0
        %v1288 = vmax.f32 %v1224, 0.0
        %v1289 = vmax.f32 %v1225, 0.0
        %v1290 = vmax.f32 %v1226, 0.0
        %v1291 = vmax.f32 %v1227, 0.0
        %v1292 = vmax.f32 %v1228, 0.0
        %v1293 = vmax.f32 %v1229, 0.0
        %v1294 = vmax.f32 %v1230, 0.0
        %v1295 = vmax.f32 %v1231, 0.0
        %v1296 = vmax.f32 %v1232, 0.0
        %v1297 = vmax.f32 %v1233, 0.0
        %v1298 = vmax.f32 %v1234, 0.0
        %v1299 = vmax.f32 %v1235, 0.0
        %v1300 = vmax.f32 %v1236, 0.0
        %v1301 = vmax.f32 %v1237, 0.0
        %v1302 = vmax.f32 %v1238, 0.0
        %v1303 = vmax.f32 %v1239, 0.0
        %v1304 = vmax.f32 %v1240, 0.0
        %v1305 = vmax.f32 %v1241, 0.0
        %v1306 = vmax.f32 %v1242, 0.0
        %v1307 = vmax.f32 %v1243, 0.0
        %v1308 = vmax.f32 %v1244, 0.0
        %v1309 = vmax.f32 %v1245, 0.0
        %v1310 = vmax.f32 %v1246, 0.0
        %v1311 = vmax.f32 %v1247, 0.0
        %v1312 = vmax.f32 %v1248, 0.0
        %v1313 = vmax.f32 %v1249, 0.0
        %v1314 = vmax.f32 %v1250, 0.0
        %v1315 = vmax.f32 %v1251, 0.0
        %v1316 = vmax.f32 %v1252, 0.0
        %v1317 = vmax.f32 %v1253, 0.0
        %v1318 = vmax.f32 %v1254, 0.0
        %v1319 = vmax.f32 %v1255, 0.0
        %v1320 = vpack.c.bf16 %v1258, %v1256
        %v1321 = vpack.c.bf16 %v1259, %v1257
        %v1322 = vpack.c.bf16 %v1262, %v1260
        %v1323 = vpack.c.bf16 %v1263, %v1261
        %v1324 = vpack.c.bf16 %v1266, %v1264
        %v1325 = vpack.c.bf16 %v1267, %v1265
        %v1326 = vpack.c.bf16 %v1270, %v1268
        %v1327 = vpack.c.bf16 %v1271, %v1269
        %v1328 = vpack.c.bf16 %v1274, %v1272
        %v1329 = vpack.c.bf16 %v1275, %v1273
        %v1330 = vpack.c.bf16 %v1278, %v1276
        %v1331 = vpack.c.bf16 %v1279, %v1277
        %v1332 = vpack.c.bf16 %v1282, %v1280
        %v1333 = vpack.c.bf16 %v1283, %v1281
        %v1334 = vpack.c.bf16 %v1286, %v1284
        %v1335 = vpack.c.bf16 %v1287, %v1285
        %v1336 = vpack.c.bf16 %v1290, %v1288
        %v1337 = vpack.c.bf16 %v1291, %v1289
        %v1338 = vpack.c.bf16 %v1294, %v1292
        %v1339 = vpack.c.bf16 %v1295, %v1293
        %v1340 = vpack.c.bf16 %v1298, %v1296
        %v1341 = vpack.c.bf16 %v1299, %v1297
        %v1342 = vpack.c.bf16 %v1302, %v1300
        %v1343 = vpack.c.bf16 %v1303, %v1301
        %v1344 = vpack.c.bf16 %v1306, %v1304
        %v1345 = vpack.c.bf16 %v1307, %v1305
        %v1346 = vpack.c.bf16 %v1310, %v1308
        %v1347 = vpack.c.bf16 %v1311, %v1309
        %v1348 = vpack.c.bf16 %v1314, %v1312
        %v1349 = vpack.c.bf16 %v1315, %v1313
        %v1350 = vpack.c.bf16 %v1318, %v1316
        %v1351 = vpack.c.bf16 %v1319, %v1317
        %v1384 = vunpack.c.l.b16 %v1320
        %v1385 = vunpack.c.l.b16 %v1321
        %v1386 = vunpack.c.h.b16 %v1320
        %v1387 = vunpack.c.h.b16 %v1321
        %v1388 = vunpack.c.l.b16 %v1322
        %v1389 = vunpack.c.l.b16 %v1323
        %v1390 = vunpack.c.h.b16 %v1322
        %v1391 = vunpack.c.h.b16 %v1323
        %v1392 = vunpack.c.l.b16 %v1324
        %v1393 = vunpack.c.l.b16 %v1325
        %v1394 = vunpack.c.h.b16 %v1324
        %v1395 = vunpack.c.h.b16 %v1325
        %v1396 = vunpack.c.l.b16 %v1326
        %v1397 = vunpack.c.l.b16 %v1327
        %v1398 = vunpack.c.h.b16 %v1326
        %v1399 = vunpack.c.h.b16 %v1327
        %v1400 = vunpack.c.l.b16 %v1328
        %v1401 = vunpack.c.l.b16 %v1329
        %v1402 = vunpack.c.h.b16 %v1328
        %v1403 = vunpack.c.h.b16 %v1329
        %v1404 = vunpack.c.l.b16 %v1330
        %v1405 = vunpack.c.l.b16 %v1331
        %v1406 = vunpack.c.h.b16 %v1330
        %v1407 = vunpack.c.h.b16 %v1331
        %v1408 = vunpack.c.l.b16 %v1332
        %v1409 = vunpack.c.l.b16 %v1333
        %v1410 = vunpack.c.h.b16 %v1332
        %v1411 = vunpack.c.h.b16 %v1333
        %v1412 = vunpack.c.l.b16 %v1334
        %v1413 = vunpack.c.l.b16 %v1335
        %v1414 = vunpack.c.h.b16 %v1334
        %v1415 = vunpack.c.h.b16 %v1335
        %v1416 = vunpack.c.l.b16 %v1336
        %v1417 = vunpack.c.l.b16 %v1337
        %v1418 = vunpack.c.h.b16 %v1336
        %v1419 = vunpack.c.h.b16 %v1337
        %v1420 = vunpack.c.l.b16 %v1338
        %v1421 = vunpack.c.l.b16 %v1339
        %v1422 = vunpack.c.h.b16 %v1338
        %v1423 = vunpack.c.h.b16 %v1339
        %v1424 = vunpack.c.l.b16 %v1340
        %v1425 = vunpack.c.l.b16 %v1341
        %v1426 = vunpack.c.h.b16 %v1340
        %v1427 = vunpack.c.h.b16 %v1341
        %v1428 = vunpack.c.l.b16 %v1342
        %v1429 = vunpack.c.l.b16 %v1343
        %v1430 = vunpack.c.h.b16 %v1342
        %v1431 = vunpack.c.h.b16 %v1343
        %v1432 = vunpack.c.l.b16 %v1344
        %v1433 = vunpack.c.l.b16 %v1345
        %v1434 = vunpack.c.h.b16 %v1344
        %v1435 = vunpack.c.h.b16 %v1345
        %v1436 = vunpack.c.l.b16 %v1346
        %v1437 = vunpack.c.l.b16 %v1347
        %v1438 = vunpack.c.h.b16 %v1346
        %v1439 = vunpack.c.h.b16 %v1347
        %v1440 = vunpack.c.l.b16 %v1348
        %v1441 = vunpack.c.l.b16 %v1349
        %v1442 = vunpack.c.h.b16 %v1348
        %v1443 = vunpack.c.h.b16 %v1349
        %v1444 = vunpack.c.l.b16 %v1350
        %v1445 = vunpack.c.l.b16 %v1351
        %v1446 = vunpack.c.h.b16 %v1350
        %v1447 = vunpack.c.h.b16 %v1351
        %v1448 = vpack.c.b16 %v1385, %v1384
        %v1449 = vpack.c.b16 %v1387, %v1386
        %v1450 = vpack.c.b16 %v1389, %v1388
        %v1451 = vpack.c.b16 %v1391, %v1390
        %v1452 = vpack.c.b16 %v1393, %v1392
        %v1453 = vpack.c.b16 %v1395, %v1394
        %v1454 = vpack.c.b16 %v1397, %v1396
        %v1455 = vpack.c.b16 %v1399, %v1398
        %v1456 = vpack.c.b16 %v1401, %v1400
        %v1457 = vpack.c.b16 %v1403, %v1402
        %v1458 = vpack.c.b16 %v1405, %v1404
        %v1459 = vpack.c.b16 %v1407, %v1406
        %v1460 = vpack.c.b16 %v1409, %v1408
        %v1461 = vpack.c.b16 %v1411, %v1410
        %v1462 = vpack.c.b16 %v1413, %v1412
        %v1463 = vpack.c.b16 %v1415, %v1414
        %v1464 = vpack.c.b16 %v1417, %v1416
        %v1465 = vpack.c.b16 %v1419, %v1418
        %v1466 = vpack.c.b16 %v1421, %v1420
        %v1467 = vpack.c.b16 %v1423, %v1422
        %v1468 = vpack.c.b16 %v1425, %v1424
        %v1469 = vpack.c.b16 %v1427, %v1426
        %v1470 = vpack.c.b16 %v1429, %v1428
        %v1471 = vpack.c.b16 %v1431, %v1430
        %v1472 = vpack.c.b16 %v1433, %v1432
        %v1473 = vpack.c.b16 %v1435, %v1434
        %v1474 = vpack.c.b16 %v1437, %v1436
        %v1475 = vpack.c.b16 %v1439, %v1438
        %v1476 = vpack.c.b16 %v1441, %v1440
        %v1477 = vpack.c.b16 %v1443, %v1442
        %v1478 = vpack.c.b16 %v1445, %v1444
        %v1479 = vpack.c.b16 %v1447, %v1446
        %1512 = vst [vmem:[%s215] sm:$0xff] %v1448
        %1513 = vst [vmem:[%s215 + $0x8] sm:$0xff] %v1449
        %1514 = vst [vmem:[%s215 + $0x10] sm:$0xff] %v1450
        %1515 = vst [vmem:[%s215 + $0x18] sm:$0xff] %v1451
        %1516 = vst [vmem:[%s215 + $0x20] sm:$0xff] %v1452
        %1517 = vst [vmem:[%s215 + $0x28] sm:$0xff] %v1453
        %1518 = vst [vmem:[%s215 + $0x30] sm:$0xff] %v1454
        %1519 = vst [vmem:[%s215 + $0x38] sm:$0xff] %v1455
        %1520 = vst [vmem:[%s215 + $0x40] sm:$0xff] %v1456
        %1521 = vst [vmem:[%s215 + $0x48] sm:$0xff] %v1457
        %1522 = vst [vmem:[%s215 + $0x50] sm:$0xff] %v1458
        %1523 = vst [vmem:[%s215 + $0x58] sm:$0xff] %v1459
        %1524 = vst [vmem:[%s215 + $0x60] sm:$0xff] %v1460
        %1525 = vst [vmem:[%s215 + $0x68] sm:$0xff] %v1461
        %1526 = vst [vmem:[%s215 + $0x70] sm:$0xff] %v1462
        %1527 = vst [vmem:[%s215 + $0x78] sm:$0xff] %v1463
        %1528 = vst [vmem:[%s215 + $0x80] sm:$0xff] %v1464
        %1529 = vst [vmem:[%s215 + $0x88] sm:$0xff] %v1465
        %1530 = vst [vmem:[%s215 + $0x90] sm:$0xff] %v1466
        %1531 = vst [vmem:[%s215 + $0x98] sm:$0xff] %v1467
        %1532 = vst [vmem:[%s215 + $0xa0] sm:$0xff] %v1468
        %1533 = vst [vmem:[%s215 + $0xa8] sm:$0xff] %v1469
        %1534 = vst [vmem:[%s215 + $0xb0] sm:$0xff] %v1470
        %1535 = vst [vmem:[%s215 + $0xb8] sm:$0xff] %v1471
        %1536 = vst [vmem:[%s215 + $0xc0] sm:$0xff] %v1472
        %1537 = vst [vmem:[%s215 + $0xc8] sm:$0xff] %v1473
        %1538 = vst [vmem:[%s215 + $0xd0] sm:$0xff] %v1474
        %1539 = vst [vmem:[%s215 + $0xd8] sm:$0xff] %v1475
        %1540 = vst [vmem:[%s215 + $0xe0] sm:$0xff] %v1476
        %1541 = vst [vmem:[%s215 + $0xe8] sm:$0xff] %v1477
        %1542 = vst [vmem:[%s215 + $0xf0] sm:$0xff] %v1478
        %1543 = vst [vmem:[%s215 + $0xf8] sm:$0xff] %v1479
        %s1544 = sand.u32 %s97, 1
        %s1545 = scalar_lea.sflag [#allocation4], %s1544
        %s1546 = sand.u32 %s97, 1
        %s1547 = smul.addr %s1546, 256
        %s1548 = scalar_lea.vmem [#allocation8], %s1547
        // Predicated region
        $region45: #{tpu_custom_call.1} parent=31 // pred_check
          %p1549 = pneg %p107
        $region46: #{tpu_custom_call.1} parent=31 // pred_check_branch
          %1551 = sbr.rel (%p1549) target = $region48
        $region47: #{tpu_custom_call.1} parent=31 // pred_region
          %s1552 = smul.u32 2, %s21
          %s1554 = ssub.s32 4096, 4096
          %1555 = vsyncadd %s1545, %s1554
          %s1556 = smul.addr %s1552, 64
          %s1557 = scalar_lea.hbm %s3, %s1556
          %s1558 = sshll.u32 %s1548, 4
          %s1559 = int_to_ptr.vmem [resolvable:$true] %s1558
          %1564 = dma.vmem_to_hbm [thread:$0]  %s1559, 4096, %s1557, %s1545, 128, 256, 8
        $region48: #{tpu_custom_call.1} parent=31 // pred_fallthru
          _
      $region32: #{tpu_custom_call.1} parent=5 // pred_fallthru
        _
      %p1565 = scmp.le.s32.totalorder 2, %s16
      // Predicated region
      $region49: #{tpu_custom_call.1} parent=5 // pred_check
        %p1566 = pneg %p1565
      $region50: #{tpu_custom_call.1} parent=5 // pred_check_branch
        %1568 = sbr.rel (%p1566) target = $region52
      $region51: #{tpu_custom_call.1} parent=5 // pred_region
        %s1569 = ssub.s32 %s16, 2
        // Predicated region
        $region53: #{tpu_custom_call.1} parent=51 // pred_check
          %p1570 = pneg %p113
        $region54: #{tpu_custom_call.1} parent=51 // pred_check_branch
          %1572 = sbr.rel (%p1570) target = $region56
        $region55: #{tpu_custom_call.1} parent=51 // pred_region
          %s1573 = sand.u32 %s98, 1
          %s1574 = scalar_lea.sflag [#allocation4], %s1573
          %s1575 = sand.u32 %s98, 1
          %s1576 = smul.addr %s1575, 256
          %s1577 = scalar_lea.vmem [#allocation8], %s1576
          %1578 = dma.done %s1574, 4096
        $region56: #{tpu_custom_call.1} parent=51 // pred_fallthru
          _
      $region52: #{tpu_custom_call.1} parent=5 // pred_fallthru
        _
    $region6: #{tpu_custom_call.1} parent=1 // loop_footer
      %s20 = sadd.s32 1, %s16
    $region7: #{tpu_custom_call.1} parent=1 // loop_footer_branch
      %15 = sbr.rel target = $region3
    $region8: #{tpu_custom_call.1} parent=1 // loop_exit
      _
    %1579 = vsyncpa [#allocation3], 1
    %s1580 = scalar_lea.sflag [#allocation3], 1
    %1581 = vsyncpa %s1580, 1
    %1582 = vsyncpa [#allocation6], 1
    %s1583 = scalar_lea.sflag [#allocation6], 1
    %1584 = vsyncpa %s1583, 1
    %1585 = vsyncpa [#allocation4], 1
    %s1586 = scalar_lea.sflag [#allocation4], 1
    %1587 = vsyncpa %s1586, 1

</llo_original>
